<compile_context>
chip_gen: v7x
topology: tpu7x:2x2x1
jax: 0.10.0
libtpu: 0.0.40
codegen_flags: <defaults>
</compile_context>

<pallas_src>
import functools

import jax
import jax.numpy as jnp
from jax import lax
from jax.experimental import pallas as pl
from jax.experimental.pallas import tpu as pltpu


def _round_up(x: int, m: int) -> int:
    return ((x + m - 1) // m) * m


def _mlp_kernel(x_ref, w1_ref, b1_ref, w2_ref, b2_ref, w3_ref, b3_ref, o_ref):
    """Fused 3-layer MLP forward, batch on the lane axis.

    x_ref  : (TILE_B, 8)   input tile in its native layout / dtype
    w1_ref : (16, 8)       w2_ref : (32, 16)      w3_ref : (32, 1)
    b1_ref : (16, 1) f32   b2_ref : (32, 1) f32   b3_ref : (1, 1) f32
    o_ref  : (1, TILE_B)   f32 output tile (lane-dense, unmasked stores)
    """
    cdt = w1_ref.dtype
    # In-kernel cast (VPU, effectively free) instead of a wrapper XLA pass.
    x = x_ref[...].astype(cdt)                                  # (TB, 8)

    # Layer 1: contract the 8-wide feature axis of both operands:
    # (16, 8) . (TB, 8)^T -> (16, TB).  Keeps batch on the lane axis; the
    # (TB,8)->(8,TB) relayout lands on the otherwise-idle XLU slot.
    h1 = lax.dot_general(w1_ref[...], x, (((1,), (1,)), ((), ())),
                         preferred_element_type=jnp.float32)
    h1 = jnp.maximum(h1 + b1_ref[...], 0.0)                     # (16, TB) f32

    # Layer 2: (32,16) @ (16,TB) -> (32,TB); f32 MXU accumulation.
    h2 = jnp.dot(w2_ref[...], h1.astype(cdt),
                 preferred_element_type=jnp.float32)
    h2 = jnp.maximum(h2 + b2_ref[...], 0.0)                     # (32, TB) f32

    # Layer 3: degenerate 1-wide output -> VPU broadcast-multiply + XLU
    # sublane reduce instead of a 1-wide MXU matmul.
    out = jnp.sum(w3_ref[...].astype(jnp.float32) * h2, axis=0, keepdims=True)
    o_ref[...] = (out + b3_ref[...]).astype(o_ref.dtype)        # lane-dense


@functools.partial(jax.jit, static_argnames=("max_tile_b",))
def simple_nn_forward(x, w1, b1, w2, b2, w3, b3, *, max_tile_b=16384):
    """x: (batch, 8) in its native dtype.  Weights in kernel layout
    (see pack_kernel_params).  Returns (batch, 1) float32."""
    assert max_tile_b % 128 == 0 and max_tile_b >= 128, \
        "max_tile_b must be a positive multiple of 128"
    batch, in_features = x.shape

    # Lane tile over batch: guarantee >= 2 grid blocks whenever batch is large
    # enough (so ("parallel",) can shard across both v7x TensorCores), capped
    # at max_tile_b.  Always a multiple of 128.
    padded128 = _round_up(batch, 128)
    tile_b = min(max_tile_b, _round_up(pl.cdiv(padded128, 2), 128))
    num_blocks = pl.cdiv(batch, tile_b)

    # No transpose / cast of x.  Only pad in the tiny single-short-block case;
    # for batch >= tile_b the (possibly partial) last block is handled by
    # Pallas and the garbage columns are sliced off below.
    if batch < tile_b:
        x = jnp.pad(x, ((0, tile_b - batch), (0, 0)))

    const = lambda shape: pl.BlockSpec(shape, lambda i: (0,) * len(shape))

    out = pl.pallas_call(
        _mlp_kernel,
        out_shape=jax.ShapeDtypeStruct((1, num_blocks * tile_b), jnp.float32),
        grid=(num_blocks,),
        in_specs=[
            # x marches along the batch axis; the last block dim (8) equals
            # the full array dim, satisfying the (8,128) tiling rule.
            # (If profiling still shows exposed input DMA, add
            #  pipeline_mode=pl.Buffered(3) to this spec only.)
            pl.BlockSpec((tile_b, in_features), lambda i: (i, 0)),
            # Parameters: constant index_maps -> DMA'd once, VMEM-resident
            # across all grid steps (~3 KB total).
            const(w1.shape), const(b1.shape),
            const(w2.shape), const(b2.shape),
            const(w3.shape), const(b3.shape),
        ],
        out_specs=pl.BlockSpec((1, tile_b), lambda i: (0, i)),
        compiler_params=pltpu.CompilerParams(
            # Independent batch tiles: shard across both TensorCores on v7x.
            dimension_semantics=("parallel",),
            # v5e's scoped-VMEM default (~16 MiB) is too small for large lane
            # tiles; 48 MiB still fits under v7x's 64 MiB physical VMEM.
            vmem_limit_bytes=48 * 1024 * 1024),
    )(x, w1, b1, w2, b2, w3, b3)

    # (1, N) -> slice to batch -> reshape to (batch, 1): slice + reshape are
    # layout-free, unlike a transpose which can materialize a copy.
    return lax.slice(out, (0, 0), (1, batch)).reshape(batch, 1)


# ----------------------------------------------------------------------------
# Parameter handling (PyTorch nn.Linear layout + default init) and reference.
# ----------------------------------------------------------------------------

def init_params(key):
    """PyTorch-layout params [(W(out,in), b(out,)), ...] with nn.Linear default
    init: U(-1/sqrt(fan_in), 1/sqrt(fan_in)) for weight and bias."""
    layers = [(8, 16), (16, 32), (32, 1)]
    params = []
    for fan_in, fan_out in layers:
        key, kw, kb = jax.random.split(key, 3)
        bound = 1.0 / (fan_in ** 0.5)
        W = jax.random.uniform(kw, (fan_out, fan_in), jnp.float32, -bound, bound)
        B = jax.random.uniform(kb, (fan_out,), jnp.float32, -bound, bound)
        params.append((W, B))
    return params


def pack_kernel_params(torch_params, weight_dtype=jnp.float32):
    """PyTorch-layout params -> kernel layout.  Weights may be bf16 (x is cast
    inside the kernel, never in the wrapper); biases stay f32."""
    (W1, B1), (W2, B2), (W3, B3) = torch_params
    return (W1.astype(weight_dtype), B1.reshape(-1, 1),
            W2.astype(weight_dtype), B2.reshape(-1, 1),
            W3.T.astype(weight_dtype),                         # (32, 1) column
            B3.reshape(1, 1))


def reference_forward(x, torch_params):
    (W1, B1), (W2, B2), (W3, B3) = torch_params
    h1 = jnp.maximum(x @ W1.T + B1, 0.0)
    h2 = jnp.maximum(h1 @ W2.T + B2, 0.0)
    return h2 @ W3.T + B3


if __name__ == "__main__":
    key = jax.random.PRNGKey(0)
    key, kx = jax.random.split(key)
    torch_params = init_params(key)
    kparams_f32 = pack_kernel_params(torch_params, jnp.float32)

    # Small-batch test (one block, padded internally to 128 lanes).
    batch = 8
    x = jax.random.normal(kx, (batch, 8), jnp.float32)
    out = jax.block_until_ready(simple_nn_forward(x, *kparams_f32))
    ref = reference_forward(x, torch_params)
    assert out.shape == (batch, 1), out.shape
    assert jnp.allclose(out, ref, atol=1e-5, rtol=1e-5), "f32 mismatch (small)"

    # Multi-block grid with a partial last block; weights stay VMEM-resident.
    key, kx2 = jax.random.split(key)
    batch2 = 300
    x2 = jax.random.normal(kx2, (batch2, 8), jnp.float32)
    out2 = jax.block_until_ready(
        simple_nn_forward(x2, *kparams_f32, max_tile_b=128))
    ref2 = reference_forward(x2, torch_params)
    assert out2.shape == (batch2, 1), out2.shape
    assert jnp.allclose(out2, ref2, atol=1e-5, rtol=1e-5), "f32 mismatch (grid)"

    # Default (large-tile, >=2-block) configuration on the same data.
    out3 = jax.block_until_ready(simple_nn_forward(x2, *kparams_f32))
    assert jnp.allclose(out3, ref2, atol=1e-5, rtol=1e-5), "f32 mismatch (tile)"

    # bf16 weights: x stays f32 in HBM and is cast inside the kernel.
    kparams_bf16 = pack_kernel_params(torch_params, jnp.bfloat16)
    out_bf16 = jax.block_until_ready(simple_nn_forward(x2, *kparams_bf16))
    assert out_bf16.shape == (batch2, 1), out_bf16.shape
    assert jnp.allclose(out_bf16, ref2, atol=1e-1, rtol=1e-1), "bf16 mismatch"

    print("KERNEL_OK")
</pallas_src>

<mosaic_0001>
module attributes {stable_mosaic.version = 11 : i64} {
  func.func @_mlp_kernel(%arg0: i32, %arg1: memref<128x8xf32, #tpu.memory_space<vmem>>, %arg2: memref<16x8xf32, #tpu.memory_space<vmem>>, %arg3: memref<16x1xf32, #tpu.memory_space<vmem>>, %arg4: memref<32x16xf32, #tpu.memory_space<vmem>>, %arg5: memref<32x1xf32, #tpu.memory_space<vmem>>, %arg6: memref<32x1xf32, #tpu.memory_space<vmem>>, %arg7: memref<1x1xf32, #tpu.memory_space<vmem>>, %arg8: memref<1x128xf32, #tpu.memory_space<vmem>>) attributes {dimension_semantics = [#tpu.dimension_semantics<parallel>], iteration_bounds = array<i64: 1>, scalar_prefetch = 0 : i64, scratch_operands = 0 : i64, tpu.core_type = #tpu.core_type<tc>, window_params = [{transform_indices = @transform_0, window_bounds = array<i64: 128, 8>}, {pipeline_mode = #tpu.pipeline_mode<synchronous>, transform_indices = @transform_1, window_bounds = array<i64: 16, 8>}, {pipeline_mode = #tpu.pipeline_mode<synchronous>, transform_indices = @transform_2, window_bounds = array<i64: 16, 1>}, {pipeline_mode = #tpu.pipeline_mode<synchronous>, transform_indices = @transform_3, window_bounds = array<i64: 32, 16>}, {pipeline_mode = #tpu.pipeline_mode<synchronous>, transform_indices = @transform_4, window_bounds = array<i64: 32, 1>}, {pipeline_mode = #tpu.pipeline_mode<synchronous>, transform_indices = @transform_5, window_bounds = array<i64: 32, 1>}, {pipeline_mode = #tpu.pipeline_mode<synchronous>, transform_indices = @transform_6, window_bounds = array<i64: 1, 1>}, {transform_indices = @transform_7, window_bounds = array<i64: 1, 128>}]} {
    %c0 = arith.constant 0 : index
    %c0_0 = arith.constant 0 : index
    %0 = vector.load %arg1[%c0, %c0_0] : memref<128x8xf32, #tpu.memory_space<vmem>>, vector<128x8xf32>
    %c0_1 = arith.constant 0 : index
    %c0_2 = arith.constant 0 : index
    %1 = vector.load %arg2[%c0_1, %c0_2] : memref<16x8xf32, #tpu.memory_space<vmem>>, vector<16x8xf32>
    %cst = arith.constant dense<0.000000e+00> : vector<16x128xf32>
    %2 = tpu.matmul %1, %0, %cst {dimension_numbers = #tpu.dot_dimension_numbers<[1], [1], [0], [0], [0, 0, 1, 0], [], []>} : vector<16x8xf32>, vector<128x8xf32>, vector<16x128xf32> -> vector<16x128xf32>
    %c0_3 = arith.constant 0 : index
    %c0_4 = arith.constant 0 : index
    %3 = vector.load %arg3[%c0_3, %c0_4] : memref<16x1xf32, #tpu.memory_space<vmem>>, vector<16x1xf32>
    %4 = vector.broadcast %3 : vector<16x1xf32> to vector<16x128xf32>
    %5 = arith.addf %2, %4 : vector<16x128xf32>
    %cst_5 = arith.constant 0.000000e+00 : f32
    %6 = vector.broadcast %cst_5 : f32 to vector<16x128xf32>
    %7 = arith.maximumf %5, %6 : vector<16x128xf32>
    %c0_6 = arith.constant 0 : index
    %c0_7 = arith.constant 0 : index
    %8 = vector.load %arg4[%c0_6, %c0_7] : memref<32x16xf32, #tpu.memory_space<vmem>>, vector<32x16xf32>
    %cst_8 = arith.constant dense<0.000000e+00> : vector<32x128xf32>
    %9 = tpu.matmul %8, %7, %cst_8 {dimension_numbers = #tpu.dot_dimension_numbers<[1], [0], [0], [1], [0, 0, 1, 1], [], []>} : vector<32x16xf32>, vector<16x128xf32>, vector<32x128xf32> -> vector<32x128xf32>
    %c0_9 = arith.constant 0 : index
    %c0_10 = arith.constant 0 : index
    %10 = vector.load %arg5[%c0_9, %c0_10] : memref<32x1xf32, #tpu.memory_space<vmem>>, vector<32x1xf32>
    %11 = vector.broadcast %10 : vector<32x1xf32> to vector<32x128xf32>
    %12 = arith.addf %9, %11 : vector<32x128xf32>
    %cst_11 = arith.constant 0.000000e+00 : f32
    %13 = vector.broadcast %cst_11 : f32 to vector<32x128xf32>
    %14 = arith.maximumf %12, %13 : vector<32x128xf32>
    %c0_12 = arith.constant 0 : index
    %c0_13 = arith.constant 0 : index
    %15 = vector.load %arg6[%c0_12, %c0_13] : memref<32x1xf32, #tpu.memory_space<vmem>>, vector<32x1xf32>
    %16 = vector.broadcast %15 : vector<32x1xf32> to vector<32x128xf32>
    %17 = arith.mulf %16, %14 : vector<32x128xf32>
    %cst_14 = arith.constant dense<0.000000e+00> : vector<128xf32>
    %18 = vector.multi_reduction <add>, %17, %cst_14 [0] : vector<32x128xf32> to vector<128xf32>
    %19 = vector.shape_cast %18 : vector<128xf32> to vector<1x128xf32>
    %c0_15 = arith.constant 0 : index
    %c0_16 = arith.constant 0 : index
    %20 = vector.load %arg7[%c0_15, %c0_16] : memref<1x1xf32, #tpu.memory_space<vmem>>, vector<1x1xf32>
    %21 = vector.broadcast %20 : vector<1x1xf32> to vector<1x128xf32>
    %22 = arith.addf %19, %21 : vector<1x128xf32>
    %c0_17 = arith.constant 0 : index
    %c0_18 = arith.constant 0 : index
    %23 = vector.load %arg8[%c0_17, %c0_18] : memref<1x128xf32, #tpu.memory_space<vmem>>, vector<1x128xf32>
    tpu.vector_store %arg8[%c0_17, %c0_18], %22 {strides = array<i32>} : memref<1x128xf32, #tpu.memory_space<vmem>>, vector<1x128xf32>,
    return
  }
  func.func @transform_0(%arg0: i32) -> (i32, i32) {
    %c0_i32 = arith.constant 0 : i32
    %c0_i32_0 = arith.constant 0 : i32
    return %arg0, %c0_i32 : i32, i32
  }
  func.func @transform_1(%arg0: i32) -> (i32, i32) {
    %c0_i32 = arith.constant 0 : i32
    %c0_i32_0 = arith.constant 0 : i32
    %c0_i32_1 = arith.constant 0 : i32
    return %c0_i32, %c0_i32_0 : i32, i32
  }
  func.func @transform_2(%arg0: i32) -> (i32, i32) {
    %c0_i32 = arith.constant 0 : i32
    %c0_i32_0 = arith.constant 0 : i32
    %c0_i32_1 = arith.constant 0 : i32
    return %c0_i32, %c0_i32_0 : i32, i32
  }
  func.func @transform_3(%arg0: i32) -> (i32, i32) {
    %c0_i32 = arith.constant 0 : i32
    %c0_i32_0 = arith.constant 0 : i32
    %c0_i32_1 = arith.constant 0 : i32
    return %c0_i32, %c0_i32_0 : i32, i32
  }
  func.func @transform_4(%arg0: i32) -> (i32, i32) {
    %c0_i32 = arith.constant 0 : i32
    %c0_i32_0 = arith.constant 0 : i32
    %c0_i32_1 = arith.constant 0 : i32
    return %c0_i32, %c0_i32_0 : i32, i32
  }
  func.func @transform_5(%arg0: i32) -> (i32, i32) {
    %c0_i32 = arith.constant 0 : i32
    %c0_i32_0 = arith.constant 0 : i32
    %c0_i32_1 = arith.constant 0 : i32
    return %c0_i32, %c0_i32_0 : i32, i32
  }
  func.func @transform_6(%arg0: i32) -> (i32, i32) {
    %c0_i32 = arith.constant 0 : i32
    %c0_i32_0 = arith.constant 0 : i32
    %c0_i32_1 = arith.constant 0 : i32
    return %c0_i32, %c0_i32_0 : i32, i32
  }
  func.func @transform_7(%arg0: i32) -> (i32, i32) {
    %c0_i32 = arith.constant 0 : i32
    %c0_i32_0 = arith.constant 0 : i32
    return %c0_i32, %arg0 : i32, i32
  }
}

</mosaic_0001>

<llo_original>
// kernel: simple_nn_forward.1
$region0: #{simple_nn_forward.1}
  #allocation0 [shape = 'u32[]', space=smem, size = 0x4, offset = 0x4, fixed_abs, tag = 'smem constant byte address 0x4 - core index']
  #allocation1 [shape = 'u32[144,128]{1,0:T(1,128)}', space=vmem, size = 0x12000, scoped, tag = 'internal scratch']
  #allocation2 [shape = 'f32[1,1]{1,0:T(1,128)S(1)}', space=vmem, size = 0x200, scoped, tag = 'scoped memory for simple_nn_forward.1']
  %s0 = inlined_call_operand.vmem [shape: f32[128,8], index: 0, kind: input, shape index: {}]
  %s1 = inlined_call_operand.vmem [shape: f32[16,8], index: 1, kind: input, shape index: {}]
  %s2 = inlined_call_operand.vmem [shape: f32[16,1], index: 2, kind: input, shape index: {}]
  %s3 = inlined_call_operand.vmem [shape: f32[32,16], index: 3, kind: input, shape index: {}]
  %s4 = inlined_call_operand.vmem [shape: f32[32,1], index: 4, kind: input, shape index: {}]
  %s5 = inlined_call_operand.vmem [shape: f32[32,1], index: 5, kind: input, shape index: {}]
  %s6 = inlined_call_operand.<no memory space> [shape: f32[1,1], index: 6, kind: input, shape index: {}]
  %s7 = inlined_call_operand.vmem [shape: f32[1,128], index: 7, kind: output, shape index: {}]
  %s8 = sld [smem:[#allocation0]]
  $region38: #{simple_nn_forward.1} parent=0
    _
  %s10 = ssub.s32 1, %s8
  %s11 = scalar_select 0, %s10, %s8
  %v12 = vstv %s6
  %13 = vst [vmem:[#allocation2] sm:$0x1] %v12
  // Predicated region
  $region2: #{simple_nn_forward.1} parent=0 // pred_check
    _
  $region3: #{simple_nn_forward.1} parent=0 // pred_check_branch
    %15 = sbr.rel (0) target = $region5
  $region4: #{simple_nn_forward.1} parent=0 // pred_region
    _
  $region5: #{simple_nn_forward.1} parent=0 // pred_fallthru
    _
  // Predicated region
  $region6: #{simple_nn_forward.1} parent=0 // pred_check
    _
  $region7: #{simple_nn_forward.1} parent=0 // pred_check_branch
    %17 = sbr.rel (0) target = $region9
  $region8: #{simple_nn_forward.1} parent=0 // pred_region
    _
  $region9: #{simple_nn_forward.1} parent=0 // pred_fallthru
    _
  // Predicated region
  $region10: #{simple_nn_forward.1} parent=0 // pred_check
    _
  $region11: #{simple_nn_forward.1} parent=0 // pred_check_branch
    %19 = sbr.rel (0) target = $region13
  $region12: #{simple_nn_forward.1} parent=0 // pred_region
    _
  $region13: #{simple_nn_forward.1} parent=0 // pred_fallthru
    _
  // Predicated region
  $region14: #{simple_nn_forward.1} parent=0 // pred_check
    _
  $region15: #{simple_nn_forward.1} parent=0 // pred_check_branch
    %21 = sbr.rel (0) target = $region17
  $region16: #{simple_nn_forward.1} parent=0 // pred_region
    _
  $region17: #{simple_nn_forward.1} parent=0 // pred_fallthru
    _
  // Predicated region
  $region18: #{simple_nn_forward.1} parent=0 // pred_check
    _
  $region19: #{simple_nn_forward.1} parent=0 // pred_check_branch
    %23 = sbr.rel (0) target = $region21
  $region20: #{simple_nn_forward.1} parent=0 // pred_region
    _
  $region21: #{simple_nn_forward.1} parent=0 // pred_fallthru
    _
  // Predicated region
  $region22: #{simple_nn_forward.1} parent=0 // pred_check
    _
  $region23: #{simple_nn_forward.1} parent=0 // pred_check_branch
    %25 = sbr.rel (0) target = $region25
  $region24: #{simple_nn_forward.1} parent=0 // pred_region
    _
  $region25: #{simple_nn_forward.1} parent=0 // pred_fallthru
    _
  // Predicated region
  $region26: #{simple_nn_forward.1} parent=0 // pred_check
    _
  $region27: #{simple_nn_forward.1} parent=0 // pred_check_branch
    %27 = sbr.rel (0) target = $region29
  $region28: #{simple_nn_forward.1} parent=0 // pred_region
    _
  $region29: #{simple_nn_forward.1} parent=0 // pred_fallthru
    _
  %v28 = vld [vmem:[%s0] sm:$0xff]
  %v29 = vld [vmem:[%s0 + $0x8] sm:$0xff]
  %v30 = vld [vmem:[%s0 + $0x10] sm:$0xff]
  %v31 = vld [vmem:[%s0 + $0x18] sm:$0xff]
  %v32 = vld [vmem:[%s0 + $0x20] sm:$0xff]
  %v33 = vld [vmem:[%s0 + $0x28] sm:$0xff]
  %v34 = vld [vmem:[%s0 + $0x30] sm:$0xff]
  %v35 = vld [vmem:[%s0 + $0x38] sm:$0xff]
  %v36 = vld [vmem:[%s0 + $0x40] sm:$0xff]
  %v37 = vld [vmem:[%s0 + $0x48] sm:$0xff]
  %v38 = vld [vmem:[%s0 + $0x50] sm:$0xff]
  %v39 = vld [vmem:[%s0 + $0x58] sm:$0xff]
  %v40 = vld [vmem:[%s0 + $0x60] sm:$0xff]
  %v41 = vld [vmem:[%s0 + $0x68] sm:$0xff]
  %v42 = vld [vmem:[%s0 + $0x70] sm:$0xff]
  %v43 = vld [vmem:[%s0 + $0x78] sm:$0xff]
  %v44 = vld [vmem:[%s1] sm:$0xff]
  %v45 = vld [vmem:[%s1 + $0x8] sm:$0xff]
  %v46 = vld [vmem:[%s2] sm:$0xff]
  %v47 = vld [vmem:[%s2 + $0x8] sm:$0xff]
  %49 = vset.pattern.permute.xlu0 0
  %50 = vperm.xlu0 %49, %v46
  %v51 = vpop.permute.xlu0 %50
  %54 = vset.pattern.permute.xlu0 0
  %55 = vperm.xlu0 %54, %v47
  %v56 = vpop.permute.xlu0 %55
  %vm58 = vcmask 64512
  %v60 = vsel %vm58, %v44, 0
  %v63 = vsel %vm58, %v45, 0
  %v66 = vsel %vm58, %v28, 0
  %v69 = vsel %vm58, %v29, 0
  %v72 = vsel %vm58, %v30, 0
  %v75 = vsel %vm58, %v31, 0
  %v78 = vsel %vm58, %v32, 0
  %v81 = vsel %vm58, %v33, 0
  %v84 = vsel %vm58, %v34, 0
  %v87 = vsel %vm58, %v35, 0
  %v90 = vsel %vm58, %v36, 0
  %v93 = vsel %vm58, %v37, 0
  %v96 = vsel %vm58, %v38, 0
  %v99 = vsel %vm58, %v39, 0
  %v102 = vsel %vm58, %v40, 0
  %v105 = vsel %vm58, %v41, 0
  %v108 = vsel %vm58, %v42, 0
  %v111 = vsel %vm58, %v43, 0
  %113 = vmatprep.subr.mxu0 0.0
  %114 = vmatpush1.xpose.msra.mxu0 %v66
  %115 = vmatprep.subr.mxu0 0.0
  %116 = vmatpush1.xpose.msra.mxu0 %v69
  %117 = vmatprep.subr.mxu0 0.0
  %118 = vmatpush1.xpose.msra.mxu0 %v72
  %119 = vmatprep.subr.mxu0 0.0
  %120 = vmatpush1.xpose.msra.mxu0 %v75
  %121 = vmatprep.subr.mxu0 0.0
  %122 = vmatpush1.xpose.msra.mxu0 %v78
  %123 = vmatprep.subr.mxu0 0.0
  %124 = vmatpush1.xpose.msra.mxu0 %v81
  %125 = vmatprep.subr.mxu0 0.0
  %126 = vmatpush1.xpose.msra.mxu0 %v84
  %127 = vmatprep.subr.mxu0 0.0
  %128 = vmatpush1.xpose.msra.mxu0 %v87
  %129 = vmatprep.subr.mxu0 0.0
  %130 = vmatpush1.xpose.msra.mxu0 %v90
  %131 = vmatprep.subr.mxu0 0.0
  %132 = vmatpush1.xpose.msra.mxu0 %v93
  %133 = vmatprep.subr.mxu0 0.0
  %134 = vmatpush1.xpose.msra.mxu0 %v96
  %135 = vmatprep.subr.mxu0 0.0
  %136 = vmatpush1.xpose.msra.mxu0 %v99
  %137 = vmatprep.subr.mxu0 0.0
  %138 = vmatpush1.xpose.msra.mxu0 %v102
  %139 = vmatprep.subr.mxu0 0.0
  %140 = vmatpush1.xpose.msra.mxu0 %v105
  %141 = vmatprep.subr.mxu0 0.0
  %142 = vmatpush1.xpose.msra.mxu0 %v108
  %143 = vmatprep.subr.mxu0 0.0
  %144 = vmatpush1.xpose.msra.mxu0 %v111
  %145 = vmatprep.subr.mxu0 0.0
  %146 = vmatpush1.xpose.msra.mxu0 0.0
  %147 = vmatprep.subr.mxu0 0.0
  %148 = vmatpush1.xpose.msra.mxu0 0.0
  %149 = vmatprep.subr.mxu0 0.0
  %150 = vmatpush1.xpose.msra.mxu0 0.0
  %151 = vmatprep.subr.mxu0 0.0
  %152 = vmatpush1.xpose.msra.mxu0 0.0
  %153 = vmatprep.subr.mxu0 0.0
  %154 = vmatpush1.xpose.msra.mxu0 0.0
  %155 = vmatprep.subr.mxu0 0.0
  %156 = vmatpush1.xpose.msra.mxu0 0.0
  %157 = vmatprep.subr.mxu0 0.0
  %158 = vmatpush1.xpose.msra.mxu0 0.0
  %159 = vmatprep.subr.mxu0 0.0
  %160 = vmatpush1.xpose.msra.mxu0 0.0
  %161 = vmatprep.subr.mxu0 0.0
  %162 = vmatpush1.xpose.msra.mxu0 0.0
  %163 = vmatprep.subr.mxu0 0.0
  %164 = vmatpush1.xpose.msra.mxu0 0.0
  %165 = vmatprep.subr.mxu0 0.0
  %166 = vmatpush1.xpose.msra.mxu0 0.0
  %167 = vmatprep.subr.mxu0 0.0
  %168 = vmatpush1.xpose.msra.mxu0 0.0
  %169 = vmatprep.subr.mxu0 0.0
  %170 = vmatpush1.xpose.msra.mxu0 0.0
  %171 = vmatprep.subr.mxu0 0.0
  %172 = vmatpush1.xpose.msra.mxu0 0.0
  %173 = vmatprep.subr.mxu0 0.0
  %174 = vmatpush1.xpose.msra.mxu0 0.0
  %175 = vmatprep.subr.mxu0 0.0
  %176 = vmatpush1.xpose.msra.mxu0 0.0
  %177 = vmatprep.mubr.f32.mxu0 0.0
  %178 = vmatmul.mubr.f32.gmra.mrb[0].mxu0 %v60
  %v179 = vpop.f32.mrb[0].mxu0
  %v180 = vadd.f32 %v51, %v179
  %v181 = vpop.f32.mrb[0].mxu0
  %182 = vmatprep.mubr.f32.mxu0 0.0
  %183 = vmatmul.mubr.f32.gmra.mrb[0].mxu0 %v63
  %v184 = vpop.f32.mrb[0].mxu0
  %v185 = vadd.f32 %v56, %v184
  %v186 = vpop.f32.mrb[0].mxu0
  %187 = vdwg.mxu0
  %v188 = vmax.f32 %v180, 0.0
  %v189 = vmax.f32 %v185, 0.0
  %v190 = vld [vmem:[%s3] sm:$0xff]
  %v191 = vld [vmem:[%s3 + $0x8] sm:$0xff]
  %v192 = vld [vmem:[%s3 + $0x10] sm:$0xff]
  %v193 = vld [vmem:[%s3 + $0x18] sm:$0xff]
  %v194 = vld [vmem:[%s4] sm:$0xff]
  %v195 = vld [vmem:[%s4 + $0x8] sm:$0xff]
  %v196 = vld [vmem:[%s4 + $0x10] sm:$0xff]
  %v197 = vld [vmem:[%s4 + $0x18] sm:$0xff]
  %199 = vset.pattern.permute.xlu0 0
  %200 = vperm.xlu0 %199, %v194
  %v201 = vpop.permute.xlu0 %200
  %204 = vset.pattern.permute.xlu0 0
  %205 = vperm.xlu0 %204, %v195
  %v206 = vpop.permute.xlu0 %205
  %209 = vset.pattern.permute.xlu0 0
  %210 = vperm.xlu0 %209, %v196
  %v211 = vpop.permute.xlu0 %210
  %214 = vset.pattern.permute.xlu0 0
  %215 = vperm.xlu0 %214, %v197
  %v216 = vpop.permute.xlu0 %215
  %vm218 = vcmask 130048
  %v220 = vsel %vm218, %v190, 0
  %v223 = vsel %vm218, %v191, 0
  %v226 = vsel %vm218, %v192, 0
  %v229 = vsel %vm218, %v193, 0
  %231 = vmatprep.subr.mxu0 0.0
  %232 = vmatpush1.msra.mxu0 %v188
  %233 = vmatprep.subr.mxu0 0.0
  %234 = vmatpush1.msra.mxu0 %v189
  %235 = vmatprep.subr.mxu0 0.0
  %236 = vmatpush1.msra.mxu0 0.0
  %237 = vmatprep.subr.mxu0 0.0
  %238 = vmatpush1.msra.mxu0 0.0
  %239 = vmatprep.subr.mxu0 0.0
  %240 = vmatpush1.msra.mxu0 0.0
  %241 = vmatprep.subr.mxu0 0.0
  %242 = vmatpush1.msra.mxu0 0.0
  %243 = vmatprep.subr.mxu0 0.0
  %244 = vmatpush1.msra.mxu0 0.0
  %245 = vmatprep.subr.mxu0 0.0
  %246 = vmatpush1.msra.mxu0 0.0
  %247 = vmatprep.subr.mxu0 0.0
  %248 = vmatpush1.msra.mxu0 0.0
  %249 = vmatprep.subr.mxu0 0.0
  %250 = vmatpush1.msra.mxu0 0.0
  %251 = vmatprep.subr.mxu0 0.0
  %252 = vmatpush1.msra.mxu0 0.0
  %253 = vmatprep.subr.mxu0 0.0
  %254 = vmatpush1.msra.mxu0 0.0
  %255 = vmatprep.subr.mxu0 0.0
  %256 = vmatpush1.msra.mxu0 0.0
  %257 = vmatprep.subr.mxu0 0.0
  %258 = vmatpush1.msra.mxu0 0.0
  %259 = vmatprep.subr.mxu0 0.0
  %260 = vmatpush1.msra.mxu0 0.0
  %261 = vmatprep.subr.mxu0 0.0
  %262 = vmatpush1.msra.mxu0 0.0
  %263 = vmatprep.subr.mxu0 0.0
  %264 = vmatpush1.msra.mxu0 0.0
  %265 = vmatprep.subr.mxu0 0.0
  %266 = vmatpush1.msra.mxu0 0.0
  %267 = vmatprep.subr.mxu0 0.0
  %268 = vmatpush1.msra.mxu0 0.0
  %269 = vmatprep.subr.mxu0 0.0
  %270 = vmatpush1.msra.mxu0 0.0
  %271 = vmatprep.subr.mxu0 0.0
  %272 = vmatpush1.msra.mxu0 0.0
  %273 = vmatprep.subr.mxu0 0.0
  %274 = vmatpush1.msra.mxu0 0.0
  %275 = vmatprep.subr.mxu0 0.0
  %276 = vmatpush1.msra.mxu0 0.0
  %277 = vmatprep.subr.mxu0 0.0
  %278 = vmatpush1.msra.mxu0 0.0
  %279 = vmatprep.subr.mxu0 0.0
  %280 = vmatpush1.msra.mxu0 0.0
  %281 = vmatprep.subr.mxu0 0.0
  %282 = vmatpush1.msra.mxu0 0.0
  %283 = vmatprep.subr.mxu0 0.0
  %284 = vmatpush1.msra.mxu0 0.0
  %285 = vmatprep.subr.mxu0 0.0
  %286 = vmatpush1.msra.mxu0 0.0
  %287 = vmatprep.subr.mxu0 0.0
  %288 = vmatpush1.msra.mxu0 0.0
  %289 = vmatprep.subr.mxu0 0.0
  %290 = vmatpush1.msra.mxu0 0.0
  %291 = vmatprep.subr.mxu0 0.0
  %292 = vmatpush1.msra.mxu0 0.0
  %293 = vmatprep.subr.mxu0 0.0
  %294 = vmatpush1.msra.mxu0 0.0
  %295 = vmatprep.mubr.f32.mxu0 0.0
  %296 = vmatmul.mubr.f32.gmra.mrb[0].mxu0 %v220
  %v297 = vpop.f32.mrb[0].mxu0
  %v298 = vadd.f32 %v201, %v297
  %v299 = vpop.f32.mrb[0].mxu0
  %300 = vmatprep.mubr.f32.mxu0 0.0
  %301 = vmatmul.mubr.f32.gmra.mrb[0].mxu0 %v223
  %v302 = vpop.f32.mrb[0].mxu0
  %v303 = vadd.f32 %v206, %v302
  %v304 = vpop.f32.mrb[0].mxu0
  %305 = vmatprep.mubr.f32.mxu0 0.0
  %306 = vmatmul.mubr.f32.gmra.mrb[0].mxu0 %v226
  %v307 = vpop.f32.mrb[0].mxu0
  %v308 = vadd.f32 %v211, %v307
  %v309 = vpop.f32.mrb[0].mxu0
  %310 = vmatprep.mubr.f32.mxu0 0.0
  %311 = vmatmul.mubr.f32.gmra.mrb[0].mxu0 %v229
  %v312 = vpop.f32.mrb[0].mxu0
  %v313 = vadd.f32 %v216, %v312
  %v314 = vpop.f32.mrb[0].mxu0
  %315 = vdwg.mxu0
  %v316 = vmax.f32 %v298, 0.0
  %v317 = vmax.f32 %v303, 0.0
  %v318 = vmax.f32 %v308, 0.0
  %v319 = vmax.f32 %v313, 0.0
  %v320 = vld [vmem:[%s5] sm:$0xff]
  %v321 = vld [vmem:[%s5 + $0x8] sm:$0xff]
  %v322 = vld [vmem:[%s5 + $0x10] sm:$0xff]
  %v323 = vld [vmem:[%s5 + $0x18] sm:$0xff]
  %325 = vset.pattern.permute.xlu0 0
  %326 = vperm.xlu0 %325, %v320
  %v327 = vpop.permute.xlu0 %326
  %330 = vset.pattern.permute.xlu0 0
  %331 = vperm.xlu0 %330, %v321
  %v332 = vpop.permute.xlu0 %331
  %335 = vset.pattern.permute.xlu0 0
  %336 = vperm.xlu0 %335, %v322
  %v337 = vpop.permute.xlu0 %336
  %340 = vset.pattern.permute.xlu0 0
  %341 = vperm.xlu0 %340, %v323
  %v342 = vpop.permute.xlu0 %341
  %v344 = vmul.f32 %v327, %v316
  %v345 = vmul.f32 %v332, %v317
  %v346 = vmul.f32 %v337, %v318
  %v347 = vmul.f32 %v342, %v319
  %v348 = vadd.f32 %v344, %v345
  %v349 = vadd.f32 %v348, %v346
  %v350 = vadd.f32 %v349, %v347
  %v351 = vrot.slane %v350, 4
  %v352 = vadd.f32 %v350, %v351
  %v353 = vrot.slane %v352, 2
  %v354 = vadd.f32 %v352, %v353
  %v355 = vrot.slane %v354, 1
  %v356 = vadd.f32 %v354, %v355
  %v357 = vld [vmem:[#allocation2] sm:$0x1]
  %359 = vset.pattern.permute.xlu0 0
  %360 = vperm.xlu0 %359, %v357
  %v361 = vpop.permute.xlu0 %360
  %v363 = vlaneseq
  %v364 = vshrl.u32 %v363, 7
  %v365 = vsub.s32 0, %v364
  %v366 = vrot.slane %v361, %v365
  %v367 = vadd.f32 %v356, %v366
  %368 = vst [vmem:[%s7] sm:$0x1] %v367
  // Predicated region
  $region30: #{simple_nn_forward.1} parent=0 // pred_check
    _
  $region31: #{simple_nn_forward.1} parent=0 // pred_check_branch
    %370 = sbr.rel (0) target = $region33
  $region32: #{simple_nn_forward.1} parent=0 // pred_region
    _
  $region33: #{simple_nn_forward.1} parent=0 // pred_fallthru
    _
  // Predicated region
  $region34: #{simple_nn_forward.1} parent=0 // pred_check
    _
  $region35: #{simple_nn_forward.1} parent=0 // pred_check_branch
    %372 = sbr.rel (0) target = $region37
  $region36: #{simple_nn_forward.1} parent=0 // pred_region
    _
  $region37: #{simple_nn_forward.1} parent=0 // pred_fallthru
    _

</llo_original>
